<compile_context>
chip_gen: v7x
topology: tpu7x:2x2x1
jax: 0.10.0
libtpu: 0.0.40
codegen_flags: <defaults>
</compile_context>

<pallas_src>
import functools
import math

import numpy as np

import jax
import jax.numpy as jnp
from jax.experimental import pallas as pl
from jax.experimental.pallas import tpu as pltpu

_PI = math.pi


def _recip(x):
    """1/x via the EUP approximate reciprocal plus one Newton-Raphson step."""
    r = pl.reciprocal(x, approx=True)
    return r * (2.0 - x * r)


def _atan2(y, x):
    """torch.atan2 semantics (atan2(0, 0) == 0) with ONE reciprocal per element.

    Octant reduction q = min(|y|,|x|)/max(|y|,|x|) in [0,1]; the Cephes
    mid-range reduction (q-1)/(q+1) is folded into the same single division by
    selecting numerator/denominator *before* the reciprocal (mn > tan(pi/8)*mx).
    """
    pi = jnp.float32(_PI)
    ay = jnp.minimum(jnp.abs(y), jnp.float32(1e37))
    ax = jnp.minimum(jnp.abs(x), jnp.float32(1e37))
    mn = jnp.minimum(ay, ax)
    mx = jnp.maximum(jnp.maximum(ay, ax), jnp.float32(1e-37))
    use_mid = mn > jnp.float32(0.4142135623730951) * mx      # q > tan(pi/8)
    num = jnp.where(use_mid, mn - mx, mn)
    den = jnp.where(use_mid, mn + mx, mx)
    t = num * _recip(den)
    z = t * t
    p = ((((jnp.float32(8.05374449538e-2) * z - jnp.float32(1.38776856032e-1)) * z
           + jnp.float32(1.99777106478e-1)) * z
          - jnp.float32(3.33329491539e-1)) * z * t + t)
    r = p + jnp.where(use_mid, jnp.float32(_PI / 4), jnp.float32(0.0))
    r = jnp.where(ay > ax, jnp.float32(_PI / 2) - r, r)       # octant swap
    r = jnp.where(x < 0.0, pi - r, r)                         # quadrant fix-up
    return jnp.where(y < 0.0, -r, r)


def _freq_loss_kernel(fh2_ref, bfr_ref, bfi_ref, wlow_ref, cw_ref, sel_ref,
                      x_ref, out_ref, *, compute_dtype):
    h = fh2_ref.shape[1]
    k = cw_ref.shape[-1]            # TN * Wr  (pred block width)
    m = x_ref.shape[-1]             # 2 * TN * W
    half = m // 2                   # TN * W
    cd = compute_dtype

    x = x_ref[0]                    # (H, 2*TN*W), pred columns first, then target

    # Stage A: H-axis DFT of all planes at once -> one MXU matmul.
    y = jnp.dot(fh2_ref[...], x.astype(cd),
                preferred_element_type=jnp.float32)            # (2H, 2*TN*W)
    yc = y.astype(cd)
    # Stage B: W-axis (rfft half-plane) DFT via block-diagonal F_W -> 2 matmuls.
    pr = jnp.dot(yc, bfr_ref[...], preferred_element_type=jnp.float32)  # (2H, 2*TN*Wr)
    qi = jnp.dot(yc, bfi_ref[...], preferred_element_type=jnp.float32)
    zr = pr[:h, :] - qi[h:, :]                                 # Re(fft2), (H, 2*TN*Wr)
    zi = qi[:h, :] + pr[h:, :]                                 # Im(fft2)

    zr_p, zr_t = zr[:, :k], zr[:, k:]
    zi_p, zi_t = zi[:, :k], zi[:, k:]

    pw_p = zr_p * zr_p + zi_p * zi_p                           # |Zp|^2
    pw_t = zr_t * zr_t + zi_t * zi_t                           # |Zt|^2
    mag_diff = jnp.abs(jnp.sqrt(pw_p) - jnp.sqrt(pw_t))

    cw = cw_ref[...]                # (1, TN*Wr) column weight {1,2} (conj symmetry)
    # magnitude L1 sum over the rfft grid
    s_mag = jnp.sum(mag_diff)
    # low / high band L1 sums over the FULL fft2 plane (high = full - low)
    s_low = jnp.sum(wlow_ref[...] * mag_diff)
    s_high = jnp.sum(cw * mag_diff) - s_low
    # wrapped phase difference: angle(Zp * conj(Zt)) is already in (-pi, pi]
    cr = zr_p * zr_t + zi_p * zi_t
    ci = zi_p * zr_t - zr_p * zi_t
    s_ph = jnp.sum(jnp.abs(_atan2(ci, cr)))
    # spectral: per plane |sum over the full plane of (|Zp|^2 - |Zt|^2)|
    e = (pw_p - pw_t) * cw                                     # (H, TN*Wr)
    plane_pow = jnp.dot(e, sel_ref[...],
                        preferred_element_type=jnp.float32)    # (H, TN)
    s_spec = jnp.sum(jnp.abs(jnp.sum(plane_pow, axis=0, keepdims=True)))
    # spatial L1 on the raw planes (zero-padded planes contribute nothing)
    s_spatial = jnp.sum(jnp.abs(x[:, :half] - x[:, half:]))

    # lane-dense per-step output row (sums in lanes 0..5)
    lane = jax.lax.broadcasted_iota(jnp.int32, (1, 8, 128), 2)
    zero = jnp.float32(0.0)
    row = jnp.where(lane == 0, s_mag,
          jnp.where(lane == 1, s_ph,
          jnp.where(lane == 2, s_low,
          jnp.where(lane == 3, s_high,
          jnp.where(lane == 4, s_spec,
          jnp.where(lane == 5, s_spatial, zero))))))
    out_ref[...] = row


def frequency_domain_perceptual_loss(pred, target, *,
                                     loss_weight=1.0, freq_weight=0.3,
                                     phase_weight=0.1, high_freq_weight=2.0,
                                     low_freq_weight=1.0,
                                     use_bf16_matmul=False):
    B, C, H, W = pred.shape
    N = B * C
    Wr = W // 2 + 1

    # ---- plane batching: TN plane pairs per grid step ----------------------
    def _step_words(tn):
        m2_, k_, m_ = 2 * tn, tn * Wr, 2 * tn * W
        consts = 2 * H * H + 2 * m_ * (2 * k_) + H * k_ + k_ + k_ * tn
        interm = 2 * H * m_ + 2 * 2 * H * (2 * k_) + 12 * H * k_
        return 2 * consts + 2 * (H * m_) + interm + 8 * 128

    # lane-density target (2*TN*Wr ~ 256), block-diag K cap (2*TN*W <= 1024),
    # VMEM budget (~12 MiB working set -> safe even on v7x's 64 MiB VMEM).
    TN = max(1, min(N, -(-128 // Wr), max(1, 512 // W), 64))
    while TN > 1 and 4 * _step_words(TN) > 12 * 2 ** 20:
        TN -= 1
    if N >= 2:                      # keep G >= 2 so v7x can shard the grid on 2 TCs
        TN = min(TN, -(-N // 2))
    G = -(-N // TN)
    Npad = G * TN

    p = pred.reshape(N, H, W).astype(jnp.float32)
    t = target.reshape(N, H, W).astype(jnp.float32)
    if Npad != N:
        pad = jnp.zeros((Npad - N, H, W), jnp.float32)
        p = jnp.concatenate([p, pad], axis=0)
        t = jnp.concatenate([t, pad], axis=0)

    m2 = 2 * TN
    K = TN * Wr
    M = m2 * W
    # Column-stacked layout: xT[g, i, s*TN*W + q*W + j] = plane (g*TN+q) of
    # pred (s=0) / target (s=1) at pixel (i, j).
    xT = (jnp.stack([p, t], axis=0)
          .reshape(2, G, TN, H, W)
          .transpose(1, 3, 0, 2, 4)
          .reshape(G, H, M))

    # ---- DFT matrices (unnormalized forward == torch's default norm) -------
    kh = np.arange(H, dtype=np.float64)
    kw = np.arange(W, dtype=np.float64)
    kr = np.arange(Wr, dtype=np.float64)
    ang_h = -2.0 * np.pi * np.outer(kh, kh) / H
    ang_w = -2.0 * np.pi * np.outer(kw, kr) / W
    mat_dtype = jnp.bfloat16 if use_bf16_matmul else jnp.float32
    fh2 = jnp.asarray(np.concatenate([np.cos(ang_h), np.sin(ang_h)], axis=0),
                      mat_dtype)                                 # (2H, H)
    eye_m2 = np.eye(m2)
    bfr = jnp.asarray(np.kron(eye_m2, np.cos(ang_w)), mat_dtype)  # (2TN*W, 2TN*Wr)
    bfi = jnp.asarray(np.kron(eye_m2, np.sin(ang_w)), mat_dtype)

    # column weights that reconstruct full-plane sums from the rfft half plane
    cwv = np.full((Wr,), 2.0)
    cwv[0] = 1.0
    if W % 2 == 0:
        cwv[W // 2] = 1.0
    # low-frequency mask of the reference (built in fftshift-ed coords there),
    # expressed directly in unshifted DFT coords, restricted to the half plane.
    hh = np.arange(H)
    ww = np.arange(Wr)
    fh_sgn = np.where(hh >= H - H // 2, hh - H, hh).astype(np.float64)[:, None]
    fw_sgn = np.where(ww >= W - W // 2, ww - W, ww).astype(np.float64)[None, :]
    fmag = np.sqrt(fh_sgn ** 2 + fw_sgn ** 2)
    thr = (min(H, W) // 2) * 0.3
    mlow = (fmag <= thr).astype(np.float64)                      # (H, Wr)
    wlow = jnp.asarray(np.tile(mlow * cwv[None, :], (1, TN)), jnp.float32)  # (H, K)
    cw_row = jnp.asarray(np.tile(cwv, TN)[None, :], jnp.float32)            # (1, K)
    sel = jnp.asarray(np.kron(np.eye(TN), np.ones((Wr, 1))), jnp.float32)   # (K, TN)

    # ---- scoped VMEM: raise above defaults, cap at ~70% of physical --------
    try:
        cap = int(0.7 * pltpu.get_tpu_info().vmem_capacity_bytes)
    except Exception:
        cap = 48 * 2 ** 20
    need = 4 * _step_words(TN)
    vmem_limit = int(min(cap, max(32 * 2 ** 20, 2 * need)))

    kernel = functools.partial(_freq_loss_kernel, compute_dtype=mat_dtype)
    out = pl.pallas_call(
        kernel,
        out_shape=jax.ShapeDtypeStruct((G, 8, 128), jnp.float32),
        grid_spec=pltpu.PrefetchScalarGridSpec(
            num_scalar_prefetch=0,
            grid=(G,),
            in_specs=[
                pl.BlockSpec((2 * H, H), lambda g: (0, 0)),       # [Re;Im] F_H
                pl.BlockSpec((M, 2 * K), lambda g: (0, 0)),       # blockdiag Re F_W
                pl.BlockSpec((M, 2 * K), lambda g: (0, 0)),       # blockdiag Im F_W
                pl.BlockSpec((H, K), lambda g: (0, 0)),           # low-band weights
                pl.BlockSpec((1, K), lambda g: (0, 0)),           # column weights
                pl.BlockSpec((K, TN), lambda g: (0, 0)),          # plane selector
                pl.BlockSpec((1, H, M), lambda g: (g, 0, 0)),     # plane-pair batch
            ],
            out_specs=pl.BlockSpec((1, 8, 128), lambda g: (g, 0, 0)),
        ),
        compiler_params=pltpu.CompilerParams(
            dimension_semantics=("parallel",),
            vmem_limit_bytes=vmem_limit,
        ),
    )(fh2, bfr, bfi, wlow, cw_row, sel, xT)

    sums = jnp.sum(out[:, 0, :6], axis=0)
    n_rfft = N * H * Wr
    n_full = N * H * W

    mag_loss = sums[0] / n_rfft
    phase_loss = sums[1] / n_rfft
    low_loss = sums[2] / n_full
    high_loss = sums[3] / n_full
    spec_loss = sums[4] / n_full      # = mean over planes of |mean power diff|
    spatial_loss = sums[5] / n_full

    fourier_loss = (mag_loss
                    + phase_weight * phase_loss
                    + low_freq_weight * low_loss
                    + high_freq_weight * high_loss
                    + 0.1 * spec_loss)
    total = spatial_loss + freq_weight * fourier_loss
    return total * loss_weight


if __name__ == "__main__":
    # FourierAwareLoss.freq_weights nn.Parameter is unused in the forward pass.
    key = jax.random.PRNGKey(0)
    k1, k2 = jax.random.split(key)
    B, C, H, W = 2, 4, 16, 16
    pred = jax.random.normal(k1, (B, C, H, W), dtype=jnp.float32)
    target = jax.random.normal(k2, (B, C, H, W), dtype=jnp.float32)

    loss = frequency_domain_perceptual_loss(pred, target)
    jax.block_until_ready(loss)
    print("KERNEL_OK")
</pallas_src>

<mosaic_0001>
module attributes {stable_mosaic.version = 11 : i64} {
  func.func @_freq_loss_kernel(%arg0: i32, %arg1: memref<32x16xf32, #tpu.memory_space<vmem>>, %arg2: memref<128x72xf32, #tpu.memory_space<vmem>>, %arg3: memref<128x72xf32, #tpu.memory_space<vmem>>, %arg4: memref<16x36xf32, #tpu.memory_space<vmem>>, %arg5: memref<1x36xf32, #tpu.memory_space<vmem>>, %arg6: memref<36x4xf32, #tpu.memory_space<vmem>>, %arg7: memref<1x16x128xf32, #tpu.memory_space<vmem>>, %arg8: memref<1x8x128xf32, #tpu.memory_space<vmem>>) attributes {dimension_semantics = [#tpu.dimension_semantics<parallel>], iteration_bounds = array<i64: 2>, scalar_prefetch = 0 : i64, scratch_operands = 0 : i64, tpu.core_type = #tpu.core_type<tc>, window_params = [{pipeline_mode = #tpu.pipeline_mode<synchronous>, transform_indices = @transform_0, window_bounds = array<i64: 32, 16>}, {pipeline_mode = #tpu.pipeline_mode<synchronous>, transform_indices = @transform_1, window_bounds = array<i64: 128, 72>}, {pipeline_mode = #tpu.pipeline_mode<synchronous>, transform_indices = @transform_2, window_bounds = array<i64: 128, 72>}, {pipeline_mode = #tpu.pipeline_mode<synchronous>, transform_indices = @transform_3, window_bounds = array<i64: 16, 36>}, {pipeline_mode = #tpu.pipeline_mode<synchronous>, transform_indices = @transform_4, window_bounds = array<i64: 1, 36>}, {pipeline_mode = #tpu.pipeline_mode<synchronous>, transform_indices = @transform_5, window_bounds = array<i64: 36, 4>}, {transform_indices = @transform_6, window_bounds = array<i64: 1, 16, 128>}, {transform_indices = @transform_7, window_bounds = array<i64: 1, 8, 128>}]} {
    %c0 = arith.constant 0 : index
    %c0_0 = arith.constant 0 : index
    %c0_1 = arith.constant 0 : index
    %0 = vector.load %arg7[%c0, %c0_0, %c0_1] : memref<1x16x128xf32, #tpu.memory_space<vmem>>, vector<1x16x128xf32>
    %1 = vector.shape_cast %0 : vector<1x16x128xf32> to vector<16x128xf32>
    %c0_2 = arith.constant 0 : index
    %c0_3 = arith.constant 0 : index
    %2 = vector.load %arg1[%c0_2, %c0_3] : memref<32x16xf32, #tpu.memory_space<vmem>>, vector<32x16xf32>
    %cst = arith.constant dense<0.000000e+00> : vector<32x128xf32>
    %3 = tpu.matmul %2, %1, %cst {dimension_numbers = #tpu.dot_dimension_numbers<[1], [0], [0], [1], [0, 0, 1, 1], [], []>} : vector<32x16xf32>, vector<16x128xf32>, vector<32x128xf32> -> vector<32x128xf32>
    %c0_4 = arith.constant 0 : index
    %c0_5 = arith.constant 0 : index
    %4 = vector.load %arg2[%c0_4, %c0_5] : memref<128x72xf32, #tpu.memory_space<vmem>>, vector<128x72xf32>
    %cst_6 = arith.constant dense<0.000000e+00> : vector<32x72xf32>
    %5 = tpu.matmul %3, %4, %cst_6 {dimension_numbers = #tpu.dot_dimension_numbers<[1], [0], [0], [1], [0, 0, 1, 1], [], []>} : vector<32x128xf32>, vector<128x72xf32>, vector<32x72xf32> -> vector<32x72xf32>
    %c0_7 = arith.constant 0 : index
    %c0_8 = arith.constant 0 : index
    %6 = vector.load %arg3[%c0_7, %c0_8] : memref<128x72xf32, #tpu.memory_space<vmem>>, vector<128x72xf32>
    %cst_9 = arith.constant dense<0.000000e+00> : vector<32x72xf32>
    %7 = tpu.matmul %3, %6, %cst_9 {dimension_numbers = #tpu.dot_dimension_numbers<[1], [0], [0], [1], [0, 0, 1, 1], [], []>} : vector<32x128xf32>, vector<128x72xf32>, vector<32x72xf32> -> vector<32x72xf32>
    %8 = vector.extract_strided_slice %5 {offsets = [0, 0], sizes = [16, 72], strides = [1, 1]} : vector<32x72xf32> to vector<16x72xf32>
    %9 = vector.extract_strided_slice %7 {offsets = [16, 0], sizes = [16, 72], strides = [1, 1]} : vector<32x72xf32> to vector<16x72xf32>
    %10 = arith.subf %8, %9 : vector<16x72xf32>
    %11 = vector.extract_strided_slice %7 {offsets = [0, 0], sizes = [16, 72], strides = [1, 1]} : vector<32x72xf32> to vector<16x72xf32>
    %12 = vector.extract_strided_slice %5 {offsets = [16, 0], sizes = [16, 72], strides = [1, 1]} : vector<32x72xf32> to vector<16x72xf32>
    %13 = arith.addf %11, %12 : vector<16x72xf32>
    %14 = vector.extract_strided_slice %10 {offsets = [0, 0], sizes = [16, 36], strides = [1, 1]} : vector<16x72xf32> to vector<16x36xf32>
    %15 = vector.extract_strided_slice %10 {offsets = [0, 36], sizes = [16, 36], strides = [1, 1]} : vector<16x72xf32> to vector<16x36xf32>
    %16 = vector.extract_strided_slice %13 {offsets = [0, 0], sizes = [16, 36], strides = [1, 1]} : vector<16x72xf32> to vector<16x36xf32>
    %17 = vector.extract_strided_slice %13 {offsets = [0, 36], sizes = [16, 36], strides = [1, 1]} : vector<16x72xf32> to vector<16x36xf32>
    %18 = arith.mulf %14, %14 : vector<16x36xf32>
    %19 = arith.mulf %16, %16 : vector<16x36xf32>
    %20 = arith.addf %18, %19 : vector<16x36xf32>
    %21 = arith.mulf %15, %15 : vector<16x36xf32>
    %22 = arith.mulf %17, %17 : vector<16x36xf32>
    %23 = arith.addf %21, %22 : vector<16x36xf32>
    %24 = math.sqrt %20 : vector<16x36xf32>
    %25 = math.sqrt %23 : vector<16x36xf32>
    %26 = arith.subf %24, %25 : vector<16x36xf32>
    %27 = math.absf %26 : vector<16x36xf32>
    %c0_10 = arith.constant 0 : index
    %c0_11 = arith.constant 0 : index
    %28 = vector.load %arg5[%c0_10, %c0_11] : memref<1x36xf32, #tpu.memory_space<vmem>>, vector<1x36xf32>
    %29 = vector.shape_cast %27 : vector<16x36xf32> to vector<1x16x36xf32>
    %cst_12 = arith.constant dense<0.000000e+00> : vector<1xf32>
    %30 = vector.multi_reduction <add>, %29, %cst_12 [1, 2] : vector<1x16x36xf32> to vector<1xf32>
    %31 = vector.shape_cast %30 : vector<1xf32> to vector<1x1x1xf32>
    %32 = vector.extract %31[0, 0, 0] : f32 from vector<1x1x1xf32>
    %c0_13 = arith.constant 0 : index
    %c0_14 = arith.constant 0 : index
    %33 = vector.load %arg4[%c0_13, %c0_14] : memref<16x36xf32, #tpu.memory_space<vmem>>, vector<16x36xf32>
    %34 = arith.mulf %33, %27 : vector<16x36xf32>
    %35 = vector.shape_cast %34 : vector<16x36xf32> to vector<1x16x36xf32>
    %cst_15 = arith.constant dense<0.000000e+00> : vector<1xf32>
    %36 = vector.multi_reduction <add>, %35, %cst_15 [1, 2] : vector<1x16x36xf32> to vector<1xf32>
    %37 = vector.shape_cast %36 : vector<1xf32> to vector<1x1x1xf32>
    %38 = vector.extract %37[0, 0, 0] : f32 from vector<1x1x1xf32>
    %39 = vector.broadcast %28 : vector<1x36xf32> to vector<16x36xf32>
    %40 = arith.mulf %39, %27 : vector<16x36xf32>
    %41 = vector.shape_cast %40 : vector<16x36xf32> to vector<1x16x36xf32>
    %cst_16 = arith.constant dense<0.000000e+00> : vector<1xf32>
    %42 = vector.multi_reduction <add>, %41, %cst_16 [1, 2] : vector<1x16x36xf32> to vector<1xf32>
    %43 = vector.shape_cast %42 : vector<1xf32> to vector<1x1x1xf32>
    %44 = vector.extract %43[0, 0, 0] : f32 from vector<1x1x1xf32>
    %45 = arith.subf %44, %38 : f32
    %46 = arith.mulf %14, %15 : vector<16x36xf32>
    %47 = arith.mulf %16, %17 : vector<16x36xf32>
    %48 = arith.addf %46, %47 : vector<16x36xf32>
    %49 = arith.mulf %16, %15 : vector<16x36xf32>
    %50 = arith.mulf %14, %17 : vector<16x36xf32>
    %51 = arith.subf %49, %50 : vector<16x36xf32>
    %52 = math.absf %51 : vector<16x36xf32>
    %cst_17 = arith.constant 9.99999993E+36 : f32
    %53 = vector.broadcast %cst_17 : f32 to vector<16x36xf32>
    %54 = arith.minimumf %52, %53 : vector<16x36xf32>
    %55 = math.absf %48 : vector<16x36xf32>
    %cst_18 = arith.constant 9.99999993E+36 : f32
    %56 = vector.broadcast %cst_18 : f32 to vector<16x36xf32>
    %57 = arith.minimumf %55, %56 : vector<16x36xf32>
    %58 = arith.minimumf %54, %57 : vector<16x36xf32>
    %59 = arith.maximumf %54, %57 : vector<16x36xf32>
    %cst_19 = arith.constant 9.99999991E-38 : f32
    %60 = vector.broadcast %cst_19 : f32 to vector<16x36xf32>
    %61 = arith.maximumf %59, %60 : vector<16x36xf32>
    %cst_20 = arith.constant 0.414213568 : f32
    %62 = vector.broadcast %cst_20 : f32 to vector<16x36xf32>
    %63 = arith.mulf %62, %61 : vector<16x36xf32>
    %64 = arith.cmpf ogt, %58, %63 : vector<16x36xf32>
    %65 = arith.subf %58, %61 : vector<16x36xf32>
    %66 = arith.select %64, %65, %58 : vector<16x36xi1>, vector<16x36xf32>
    %67 = arith.addf %58, %61 : vector<16x36xf32>
    %68 = arith.select %64, %67, %61 : vector<16x36xi1>, vector<16x36xf32>
    %69 = tpu.reciprocal %68 {approx = true} : vector<16x36xf32> -> vector<16x36xf32>
    %70 = arith.mulf %68, %69 : vector<16x36xf32>
    %cst_21 = arith.constant 2.000000e+00 : f32
    %71 = vector.broadcast %cst_21 : f32 to vector<16x36xf32>
    %72 = arith.subf %71, %70 : vector<16x36xf32>
    %73 = arith.mulf %69, %72 : vector<16x36xf32>
    %74 = arith.mulf %66, %73 : vector<16x36xf32>
    %75 = arith.mulf %74, %74 : vector<16x36xf32>
    %cst_22 = arith.constant 0.0805374458 : f32
    %76 = vector.broadcast %cst_22 : f32 to vector<16x36xf32>
    %77 = arith.mulf %76, %75 : vector<16x36xf32>
    %cst_23 = arith.constant 0.138776854 : f32
    %78 = vector.broadcast %cst_23 : f32 to vector<16x36xf32>
    %79 = arith.subf %77, %78 : vector<16x36xf32>
    %80 = arith.mulf %79, %75 : vector<16x36xf32>
    %cst_24 = arith.constant 0.199777111 : f32
    %81 = vector.broadcast %cst_24 : f32 to vector<16x36xf32>
    %82 = arith.addf %80, %81 : vector<16x36xf32>
    %83 = arith.mulf %82, %75 : vector<16x36xf32>
    %cst_25 = arith.constant 0.333329499 : f32
    %84 = vector.broadcast %cst_25 : f32 to vector<16x36xf32>
    %85 = arith.subf %83, %84 : vector<16x36xf32>
    %86 = arith.mulf %85, %75 : vector<16x36xf32>
    %87 = arith.mulf %86, %74 : vector<16x36xf32>
    %88 = arith.addf %87, %74 : vector<16x36xf32>
    %cst_26 = arith.constant 0.785398185 : f32
    %cst_27 = arith.constant 0.000000e+00 : f32
    %89 = vector.broadcast %cst_26 : f32 to vector<16x36xf32>
    %90 = vector.broadcast %cst_27 : f32 to vector<16x36xf32>
    %91 = arith.select %64, %89, %90 : vector<16x36xi1>, vector<16x36xf32>
    %92 = arith.addf %88, %91 : vector<16x36xf32>
    %93 = arith.cmpf ogt, %54, %57 : vector<16x36xf32>
    %cst_28 = arith.constant 1.57079637 : f32
    %94 = vector.broadcast %cst_28 : f32 to vector<16x36xf32>
    %95 = arith.subf %94, %92 : vector<16x36xf32>
    %96 = arith.select %93, %95, %92 : vector<16x36xi1>, vector<16x36xf32>
    %cst_29 = arith.constant 0.000000e+00 : f32
    %97 = vector.broadcast %cst_29 : f32 to vector<16x36xf32>
    %98 = arith.cmpf olt, %48, %97 : vector<16x36xf32>
    %cst_30 = arith.constant 3.14159274 : f32
    %99 = vector.broadcast %cst_30 : f32 to vector<16x36xf32>
    %100 = arith.subf %99, %96 : vector<16x36xf32>
    %101 = arith.select %98, %100, %96 : vector<16x36xi1>, vector<16x36xf32>
    %cst_31 = arith.constant 0.000000e+00 : f32
    %102 = vector.broadcast %cst_31 : f32 to vector<16x36xf32>
    %103 = arith.cmpf olt, %51, %102 : vector<16x36xf32>
    %cst_32 = arith.constant 0.000000e+00 : f32
    %104 = vector.broadcast %cst_32 : f32 to vector<16x36xf32>
    %105 = arith.subf %104, %101 : vector<16x36xf32>
    %106 = arith.select %103, %105, %101 : vector<16x36xi1>, vector<16x36xf32>
    %107 = math.absf %106 : vector<16x36xf32>
    %108 = vector.shape_cast %107 : vector<16x36xf32> to vector<1x16x36xf32>
    %cst_33 = arith.constant dense<0.000000e+00> : vector<1xf32>
    %109 = vector.multi_reduction <add>, %108, %cst_33 [1, 2] : vector<1x16x36xf32> to vector<1xf32>
    %110 = vector.shape_cast %109 : vector<1xf32> to vector<1x1x1xf32>
    %111 = vector.extract %110[0, 0, 0] : f32 from vector<1x1x1xf32>
    %112 = arith.subf %20, %23 : vector<16x36xf32>
    %113 = vector.broadcast %28 : vector<1x36xf32> to vector<16x36xf32>
    %114 = arith.mulf %112, %113 : vector<16x36xf32>
    %c0_34 = arith.constant 0 : index
    %c0_35 = arith.constant 0 : index
    %115 = vector.load %arg6[%c0_34, %c0_35] : memref<36x4xf32, #tpu.memory_space<vmem>>, vector<36x4xf32>
    %cst_36 = arith.constant dense<0.000000e+00> : vector<16x4xf32>
    %116 = tpu.matmul %114, %115, %cst_36 {dimension_numbers = #tpu.dot_dimension_numbers<[1], [0], [0], [1], [0, 0, 1, 1], [], []>} : vector<16x36xf32>, vector<36x4xf32>, vector<16x4xf32> -> vector<16x4xf32>
    %cst_37 = arith.constant dense<0.000000e+00> : vector<4xf32>
    %117 = vector.multi_reduction <add>, %116, %cst_37 [0] : vector<16x4xf32> to vector<4xf32>
    %118 = vector.shape_cast %117 : vector<4xf32> to vector<1x4xf32>
    %119 = math.absf %118 : vector<1x4xf32>
    %120 = vector.shape_cast %119 : vector<1x4xf32> to vector<1x1x4xf32>
    %cst_38 = arith.constant dense<0.000000e+00> : vector<1xf32>
    %121 = vector.multi_reduction <add>, %120, %cst_38 [1, 2] : vector<1x1x4xf32> to vector<1xf32>
    %122 = vector.shape_cast %121 : vector<1xf32> to vector<1x1x1xf32>
    %123 = vector.extract %122[0, 0, 0] : f32 from vector<1x1x1xf32>
    %124 = vector.extract_strided_slice %1 {offsets = [0, 0], sizes = [16, 64], strides = [1, 1]} : vector<16x128xf32> to vector<16x64xf32>
    %125 = vector.extract_strided_slice %1 {offsets = [0, 64], sizes = [16, 64], strides = [1, 1]} : vector<16x128xf32> to vector<16x64xf32>
    %126 = arith.subf %124, %125 : vector<16x64xf32>
    %127 = math.absf %126 : vector<16x64xf32>
    %128 = vector.shape_cast %127 : vector<16x64xf32> to vector<1x16x64xf32>
    %cst_39 = arith.constant dense<0.000000e+00> : vector<1xf32>
    %129 = vector.multi_reduction <add>, %128, %cst_39 [1, 2] : vector<1x16x64xf32> to vector<1xf32>
    %130 = vector.shape_cast %129 : vector<1xf32> to vector<1x1x1xf32>
    %131 = vector.extract %130[0, 0, 0] : f32 from vector<1x1x1xf32>
    %132 = tpu.iota {dimensions = array<i32: 2>} : vector<1x8x128xi32>
    %c0_i32 = arith.constant 0 : i32
    %133 = vector.broadcast %c0_i32 : i32 to vector<1x8x128xi32>
    %134 = arith.cmpi eq, %132, %133 : vector<1x8x128xi32>
    %c1_i32 = arith.constant 1 : i32
    %135 = vector.broadcast %c1_i32 : i32 to vector<1x8x128xi32>
    %136 = arith.cmpi eq, %132, %135 : vector<1x8x128xi32>
    %c2_i32 = arith.constant 2 : i32
    %137 = vector.broadcast %c2_i32 : i32 to vector<1x8x128xi32>
    %138 = arith.cmpi eq, %132, %137 : vector<1x8x128xi32>
    %c3_i32 = arith.constant 3 : i32
    %139 = vector.broadcast %c3_i32 : i32 to vector<1x8x128xi32>
    %140 = arith.cmpi eq, %132, %139 : vector<1x8x128xi32>
    %c4_i32 = arith.constant 4 : i32
    %141 = vector.broadcast %c4_i32 : i32 to vector<1x8x128xi32>
    %142 = arith.cmpi eq, %132, %141 : vector<1x8x128xi32>
    %c5_i32 = arith.constant 5 : i32
    %143 = vector.broadcast %c5_i32 : i32 to vector<1x8x128xi32>
    %144 = arith.cmpi eq, %132, %143 : vector<1x8x128xi32>
    %cst_40 = arith.constant 0.000000e+00 : f32
    %145 = vector.broadcast %131 : f32 to vector<1x8x128xf32>
    %146 = vector.broadcast %cst_40 : f32 to vector<1x8x128xf32>
    %147 = arith.select %144, %145, %146 : vector<1x8x128xi1>, vector<1x8x128xf32>
    %148 = vector.broadcast %123 : f32 to vector<1x8x128xf32>
    %149 = arith.select %142, %148, %147 : vector<1x8x128xi1>, vector<1x8x128xf32>
    %150 = vector.broadcast %45 : f32 to vector<1x8x128xf32>
    %151 = arith.select %140, %150, %149 : vector<1x8x128xi1>, vector<1x8x128xf32>
    %152 = vector.broadcast %38 : f32 to vector<1x8x128xf32>
    %153 = arith.select %138, %152, %151 : vector<1x8x128xi1>, vector<1x8x128xf32>
    %154 = vector.broadcast %111 : f32 to vector<1x8x128xf32>
    %155 = arith.select %136, %154, %153 : vector<1x8x128xi1>, vector<1x8x128xf32>
    %156 = vector.broadcast %32 : f32 to vector<1x8x128xf32>
    %157 = arith.select %134, %156, %155 : vector<1x8x128xi1>, vector<1x8x128xf32>
    %c0_41 = arith.constant 0 : index
    %c0_42 = arith.constant 0 : index
    %c0_43 = arith.constant 0 : index
    %158 = vector.load %arg8[%c0_41, %c0_42, %c0_43] : memref<1x8x128xf32, #tpu.memory_space<vmem>>, vector<1x8x128xf32>
    tpu.vector_store %arg8[%c0_41, %c0_42, %c0_43], %157 {strides = array<i32>} : memref<1x8x128xf32, #tpu.memory_space<vmem>>, vector<1x8x128xf32>,
    return
  }
  func.func @transform_0(%arg0: i32) -> (i32, i32) {
    %c0_i32 = arith.constant 0 : i32
    %c0_i32_0 = arith.constant 0 : i32
    %c0_i32_1 = arith.constant 0 : i32
    return %c0_i32, %c0_i32_0 : i32, i32
  }
  func.func @transform_1(%arg0: i32) -> (i32, i32) {
    %c0_i32 = arith.constant 0 : i32
    %c0_i32_0 = arith.constant 0 : i32
    %c0_i32_1 = arith.constant 0 : i32
    return %c0_i32, %c0_i32_0 : i32, i32
  }
  func.func @transform_2(%arg0: i32) -> (i32, i32) {
    %c0_i32 = arith.constant 0 : i32
    %c0_i32_0 = arith.constant 0 : i32
    %c0_i32_1 = arith.constant 0 : i32
    return %c0_i32, %c0_i32_0 : i32, i32
  }
  func.func @transform_3(%arg0: i32) -> (i32, i32) {
    %c0_i32 = arith.constant 0 : i32
    %c0_i32_0 = arith.constant 0 : i32
    %c0_i32_1 = arith.constant 0 : i32
    return %c0_i32, %c0_i32_0 : i32, i32
  }
  func.func @transform_4(%arg0: i32) -> (i32, i32) {
    %c0_i32 = arith.constant 0 : i32
    %c0_i32_0 = arith.constant 0 : i32
    %c0_i32_1 = arith.constant 0 : i32
    return %c0_i32, %c0_i32_0 : i32, i32
  }
  func.func @transform_5(%arg0: i32) -> (i32, i32) {
    %c0_i32 = arith.constant 0 : i32
    %c0_i32_0 = arith.constant 0 : i32
    %c0_i32_1 = arith.constant 0 : i32
    return %c0_i32, %c0_i32_0 : i32, i32
  }
  func.func @transform_6(%arg0: i32) -> (i32, i32, i32) {
    %c0_i32 = arith.constant 0 : i32
    %c0_i32_0 = arith.constant 0 : i32
    %c0_i32_1 = arith.constant 0 : i32
    return %arg0, %c0_i32, %c0_i32_0 : i32, i32, i32
  }
  func.func @transform_7(%arg0: i32) -> (i32, i32, i32) {
    %c0_i32 = arith.constant 0 : i32
    %c0_i32_0 = arith.constant 0 : i32
    %c0_i32_1 = arith.constant 0 : i32
    return %arg0, %c0_i32, %c0_i32_0 : i32, i32, i32
  }
}

</mosaic_0001>

<llo_original>
// kernel: tpu_custom_call.1
$region0: #{tpu_custom_call.1}
  #allocation0 [shape = 'u32[]', space=smem, size = 0x4, offset = 0x4, fixed_abs, tag = 'smem constant byte address 0x4 - core index']
  #allocation1 [shape = 'u32[144,128]{1,0:T(1,128)}', space=vmem, size = 0x12000, scoped, tag = 'internal scratch']
  %s0 = inlined_call_operand.vmem [shape: f32[32,16], index: 0, kind: input, shape index: {}]
  %s1 = inlined_call_operand.vmem [shape: f32[128,72], index: 1, kind: input, shape index: {}]
  %s2 = inlined_call_operand.vmem [shape: f32[128,72], index: 2, kind: input, shape index: {}]
  %s3 = inlined_call_operand.vmem [shape: f32[16,36], index: 3, kind: input, shape index: {}]
  %s4 = inlined_call_operand.vmem [shape: f32[1,36], index: 4, kind: input, shape index: {}]
  %s5 = inlined_call_operand.vmem [shape: f32[36,4], index: 5, kind: input, shape index: {}]
  %s6 = inlined_call_operand.vmem [shape: f32[2,16,128], index: 6, kind: input, shape index: {}]
  %s7 = inlined_call_operand.hbm [shape: f32[2,8,128], index: 7, kind: output, shape index: {}]
  %s8 = sld [smem:[#allocation0]]
  $region61: #{tpu_custom_call.1} parent=0
    _
  %s10 = ssub.s32 1, %s8
  %s11 = scalar_select 0, %s10, %s8
  $region1: #{tpu_custom_call.1} parent=0
    #allocation2 [shape = 'u8[8192]{0}', space=vmem, size = 0x2000, scoped, tag = 'output window, operand 0']
    #allocation3 [shape = 's32[2]{0}', space=sflag, size = 0x8, scoped, tag = 'scoped memory for tpu_custom_call.1']
    %12 = vsyncpa [#allocation3], 0
    %s13 = scalar_lea.sflag [#allocation3], 1
    %14 = vsyncpa %s13, 0
    loop: start=0, step=1, limit=4
    $region2: #{tpu_custom_call.1} parent=1 // loop_pre_header
      _
    $region3: #{tpu_custom_call.1} parent=1 // loop_header
      %s16 = sphi 0, %s20
      %p17 = scmp.ge.s32.totalorder %s16, 4
      %s24 = sphi 0, %s24
      %s26 = sphi 0, %s24
      %s27 = sphi 0, %s26
      %s41 = sphi 0, %s27
      %s45 = sphi 0, %s45
      %s47 = sphi 0, %s45
      %s48 = sphi 0, %s47
      %s62 = sphi 0, %s48
      %s66 = sphi 0, %s66
      %s68 = sphi 0, %s66
      %s69 = sphi 0, %s68
      %s83 = sphi 0, %s69
      %s87 = sphi 0, %s87
      %s89 = sphi 0, %s87
      %s90 = sphi 0, %s89
      %s104 = sphi 0, %s90
      %s108 = sphi 0, %s108
      %s110 = sphi 0, %s108
      %s111 = sphi 0, %s110
      %s125 = sphi 0, %s111
      %s129 = sphi 0, %s129
      %s131 = sphi 0, %s129
      %s132 = sphi 0, %s131
      %s146 = sphi 0, %s132
      %s152 = sphi 0, %s154
      %s155 = sphi 0, %s152
      %s156 = sphi 0, %s155
      %s172 = sphi 0, %s156
      %s178 = sphi 0, %s180
      %s181 = sphi 0, %s178
      %s182 = sphi 0, %s181
      %s198 = sphi 0, %s182
    $region4: #{tpu_custom_call.1} parent=1 // loop_header_branch
      %19 = sbr.rel (%p17) target = $region8
    $region5: #{tpu_custom_call.1} parent=1 // loop_body
      %s21 = ssub.s32 %s16, 1
      %s22 = ssub.s32 %s16, 2
      %s23 = sadd.s32 %s16, 1
      %s25 = sadd.s32 %s24, 1
      %p28 = scmp.eq.s32.totalorder %s16, 1
      %p29 = scmp.ne.s32.totalorder %s24, %s26
      %p30 = scmp.eq.s32.totalorder %s16, 0
      %p31 = por %p29, %p30
      %p32 = scmp.ne.s32.totalorder %s24, %s26
      %p33 = scmp.eq.s32.totalorder %s21, 1
      %p34 = por %p32, %p33
      %p35 = scmp.ne.s32.totalorder %s26, %s27
      %p36 = scmp.eq.s32.totalorder %s21, 0
      %p37 = por %p35, %p36
      %p38 = scmp.ne.s32.totalorder %s26, %s27
      %p39 = scmp.eq.s32.totalorder %s22, 1
      %p40 = por %p38, %p39
      %p42 = scmp.ne.s32.totalorder %s27, %s41
      %p43 = scmp.eq.s32.totalorder %s22, 0
      %p44 = por %p42, %p43
      %s46 = sadd.s32 %s45, 1
      %p49 = scmp.eq.s32.totalorder %s16, 1
      %p50 = scmp.ne.s32.totalorder %s45, %s47
      %p51 = scmp.eq.s32.totalorder %s16, 0
      %p52 = por %p50, %p51
      %p53 = scmp.ne.s32.totalorder %s45, %s47
      %p54 = scmp.eq.s32.totalorder %s21, 1
      %p55 = por %p53, %p54
      %p56 = scmp.ne.s32.totalorder %s47, %s48
      %p57 = scmp.eq.s32.totalorder %s21, 0
      %p58 = por %p56, %p57
      %p59 = scmp.ne.s32.totalorder %s47, %s48
      %p60 = scmp.eq.s32.totalorder %s22, 1
      %p61 = por %p59, %p60
      %p63 = scmp.ne.s32.totalorder %s48, %s62
      %p64 = scmp.eq.s32.totalorder %s22, 0
      %p65 = por %p63, %p64
      %s67 = sadd.s32 %s66, 1
      %p70 = scmp.eq.s32.totalorder %s16, 1
      %p71 = scmp.ne.s32.totalorder %s66, %s68
      %p72 = scmp.eq.s32.totalorder %s16, 0
      %p73 = por %p71, %p72
      %p74 = scmp.ne.s32.totalorder %s66, %s68
      %p75 = scmp.eq.s32.totalorder %s21, 1
      %p76 = por %p74, %p75
      %p77 = scmp.ne.s32.totalorder %s68, %s69
      %p78 = scmp.eq.s32.totalorder %s21, 0
      %p79 = por %p77, %p78
      %p80 = scmp.ne.s32.totalorder %s68, %s69
      %p81 = scmp.eq.s32.totalorder %s22, 1
      %p82 = por %p80, %p81
      %p84 = scmp.ne.s32.totalorder %s69, %s83
      %p85 = scmp.eq.s32.totalorder %s22, 0
      %p86 = por %p84, %p85
      %s88 = sadd.s32 %s87, 1
      %p91 = scmp.eq.s32.totalorder %s16, 1
      %p92 = scmp.ne.s32.totalorder %s87, %s89
      %p93 = scmp.eq.s32.totalorder %s16, 0
      %p94 = por %p92, %p93
      %p95 = scmp.ne.s32.totalorder %s87, %s89
      %p96 = scmp.eq.s32.totalorder %s21, 1
      %p97 = por %p95, %p96
      %p98 = scmp.ne.s32.totalorder %s89, %s90
      %p99 = scmp.eq.s32.totalorder %s21, 0
      %p100 = por %p98, %p99
      %p101 = scmp.ne.s32.totalorder %s89, %s90
      %p102 = scmp.eq.s32.totalorder %s22, 1
      %p103 = por %p101, %p102
      %p105 = scmp.ne.s32.totalorder %s90, %s104
      %p106 = scmp.eq.s32.totalorder %s22, 0
      %p107 = por %p105, %p106
      %s109 = sadd.s32 %s108, 1
      %p112 = scmp.eq.s32.totalorder %s16, 1
      %p113 = scmp.ne.s32.totalorder %s108, %s110
      %p114 = scmp.eq.s32.totalorder %s16, 0
      %p115 = por %p113, %p114
      %p116 = scmp.ne.s32.totalorder %s108, %s110
      %p117 = scmp.eq.s32.totalorder %s21, 1
      %p118 = por %p116, %p117
      %p119 = scmp.ne.s32.totalorder %s110, %s111
      %p120 = scmp.eq.s32.totalorder %s21, 0
      %p121 = por %p119, %p120
      %p122 = scmp.ne.s32.totalorder %s110, %s111
      %p123 = scmp.eq.s32.totalorder %s22, 1
      %p124 = por %p122, %p123
      %p126 = scmp.ne.s32.totalorder %s111, %s125
      %p127 = scmp.eq.s32.totalorder %s22, 0
      %p128 = por %p126, %p127
      %s130 = sadd.s32 %s129, 1
      %p133 = scmp.eq.s32.totalorder %s16, 1
      %p134 = scmp.ne.s32.totalorder %s129, %s131
      %p135 = scmp.eq.s32.totalorder %s16, 0
      %p136 = por %p134, %p135
      %p137 = scmp.ne.s32.totalorder %s129, %s131
      %p138 = scmp.eq.s32.totalorder %s21, 1
      %p139 = por %p137, %p138
      %p140 = scmp.ne.s32.totalorder %s131, %s132
      %p141 = scmp.eq.s32.totalorder %s21, 0
      %p142 = por %p140, %p141
      %p143 = scmp.ne.s32.totalorder %s131, %s132
      %p144 = scmp.eq.s32.totalorder %s22, 1
      %p145 = por %p143, %p144
      %p147 = scmp.ne.s32.totalorder %s132, %s146
      %p148 = scmp.eq.s32.totalorder %s22, 0
      %p149 = por %p147, %p148
      %s150 = ssub.s32 %s16, %s23
      %p151 = scmp.eq.s32.totalorder %s150, 0
      %s153 = sadd.s32 %s152, 1
      %s154 = scalar_select %p151, %s152, %s153
      %p157 = pneg %p151
      %p158 = scmp.eq.s32.totalorder %s16, 1
      %p159 = por %p157, %p158
      %p160 = scmp.ne.s32.totalorder %s152, %s155
      %p161 = scmp.eq.s32.totalorder %s16, 0
      %p162 = por %p160, %p161
      %p163 = scmp.ne.s32.totalorder %s152, %s155
      %p164 = scmp.eq.s32.totalorder %s21, 1
      %p165 = por %p163, %p164
      %p166 = scmp.ne.s32.totalorder %s155, %s156
      %p167 = scmp.eq.s32.totalorder %s21, 0
      %p168 = por %p166, %p167
      %p169 = scmp.ne.s32.totalorder %s155, %s156
      %p170 = scmp.eq.s32.totalorder %s22, 1
      %p171 = por %p169, %p170
      %p173 = scmp.ne.s32.totalorder %s156, %s172
      %p174 = scmp.eq.s32.totalorder %s22, 0
      %p175 = por %p173, %p174
      %s176 = ssub.s32 %s16, %s23
      %p177 = scmp.eq.s32.totalorder %s176, 0
      %s179 = sadd.s32 %s178, 1
      %s180 = scalar_select %p177, %s178, %s179
      %p183 = pneg %p177
      %p184 = scmp.eq.s32.totalorder %s16, 1
      %p185 = por %p183, %p184
      %p186 = scmp.ne.s32.totalorder %s178, %s181
      %p187 = scmp.eq.s32.totalorder %s16, 0
      %p188 = por %p186, %p187
      %p189 = scmp.ne.s32.totalorder %s178, %s181
      %p190 = scmp.eq.s32.totalorder %s21, 1
      %p191 = por %p189, %p190
      %p192 = scmp.ne.s32.totalorder %s181, %s182
      %p193 = scmp.eq.s32.totalorder %s21, 0
      %p194 = por %p192, %p193
      %p195 = scmp.ne.s32.totalorder %s181, %s182
      %p196 = scmp.eq.s32.totalorder %s22, 1
      %p197 = por %p195, %p196
      %p199 = scmp.ne.s32.totalorder %s182, %s198
      %p200 = scmp.eq.s32.totalorder %s22, 0
      %p201 = por %p199, %p200
      %p202 = scmp.le.s32.totalorder 1, %s16
      %p203 = scmp.lt.s32.totalorder %s16, 3
      %p204 = pnand %p202, %p203
      %p205 = pneg %p204
      // Predicated region
      $region9: #{tpu_custom_call.1} parent=5 // pred_check
        _
      $region10: #{tpu_custom_call.1} parent=5 // pred_check_branch
        %207 = sbr.rel (%p204) target = $region12
      $region11: #{tpu_custom_call.1} parent=5 // pred_region
        %s208 = ssub.s32 %s16, 1
        // Predicated region
        $region13: #{tpu_custom_call.1} parent=11 // pred_check
          %p209 = pneg %p37
        $region14: #{tpu_custom_call.1} parent=11 // pred_check_branch
          %211 = sbr.rel (%p209) target = $region16
        $region15: #{tpu_custom_call.1} parent=11 // pred_region
          _
        $region16: #{tpu_custom_call.1} parent=11 // pred_fallthru
          _
        // Predicated region
        $region17: #{tpu_custom_call.1} parent=11 // pred_check
          %p212 = pneg %p58
        $region18: #{tpu_custom_call.1} parent=11 // pred_check_branch
          %214 = sbr.rel (%p212) target = $region20
        $region19: #{tpu_custom_call.1} parent=11 // pred_region
          _
        $region20: #{tpu_custom_call.1} parent=11 // pred_fallthru
          _
        // Predicated region
        $region21: #{tpu_custom_call.1} parent=11 // pred_check
          %p215 = pneg %p79
        $region22: #{tpu_custom_call.1} parent=11 // pred_check_branch
          %217 = sbr.rel (%p215) target = $region24
        $region23: #{tpu_custom_call.1} parent=11 // pred_region
          _
        $region24: #{tpu_custom_call.1} parent=11 // pred_fallthru
          _
        // Predicated region
        $region25: #{tpu_custom_call.1} parent=11 // pred_check
          %p218 = pneg %p100
        $region26: #{tpu_custom_call.1} parent=11 // pred_check_branch
          %220 = sbr.rel (%p218) target = $region28
        $region27: #{tpu_custom_call.1} parent=11 // pred_region
          _
        $region28: #{tpu_custom_call.1} parent=11 // pred_fallthru
          _
        // Predicated region
        $region29: #{tpu_custom_call.1} parent=11 // pred_check
          %p221 = pneg %p121
        $region30: #{tpu_custom_call.1} parent=11 // pred_check_branch
          %223 = sbr.rel (%p221) target = $region32
        $region31: #{tpu_custom_call.1} parent=11 // pred_region
          _
        $region32: #{tpu_custom_call.1} parent=11 // pred_fallthru
          _
        // Predicated region
        $region33: #{tpu_custom_call.1} parent=11 // pred_check
          %p224 = pneg %p142
        $region34: #{tpu_custom_call.1} parent=11 // pred_check_branch
          %226 = sbr.rel (%p224) target = $region36
        $region35: #{tpu_custom_call.1} parent=11 // pred_region
          _
        $region36: #{tpu_custom_call.1} parent=11 // pred_fallthru
          _
      $region12: #{tpu_custom_call.1} parent=5 // pred_fallthru
        _
      %p227 = scmp.lt.s32.totalorder %s16, 2
      // Predicated region
      $region37: #{tpu_custom_call.1} parent=5 // pred_check
        %p228 = pneg %p227
      $region38: #{tpu_custom_call.1} parent=5 // pred_check_branch
        %230 = sbr.rel (%p228) target = $region40
      $region39: #{tpu_custom_call.1} parent=5 // pred_region
        // Predicated region
        $region41: #{tpu_custom_call.1} parent=39 // pred_check
          %p231 = pneg %p162
        $region42: #{tpu_custom_call.1} parent=39 // pred_check_branch
          %233 = sbr.rel (%p231) target = $region44
        $region43: #{tpu_custom_call.1} parent=39 // pred_region
          %p234 = scmp.lt.s32.totalorder %s16, 1
          %s235 = scalar_select %p234, %s16, 1
          %s236 = smul.addr %s235, 2
          %s237 = smul.addr %s236, 8
          %s238 = scalar_lea.vmem %s6, %s237
        $region44: #{tpu_custom_call.1} parent=39 // pred_fallthru
          _
      $region40: #{tpu_custom_call.1} parent=5 // pred_fallthru
        _
      %p239 = scmp.le.s32.totalorder 1, %s16
      %p240 = scmp.lt.s32.totalorder %s16, 3
      %p241 = pnand %p239, %p240
      %p242 = pneg %p241
      // Predicated region
      $region45: #{tpu_custom_call.1} parent=5 // pred_check
        _
      $region46: #{tpu_custom_call.1} parent=5 // pred_check_branch
        %244 = sbr.rel (%p241) target = $region48
      $region47: #{tpu_custom_call.1} parent=5 // pred_region
        %s245 = ssub.s32 %s16, 1
        %p246 = pneg %p37
        %p247 = pneg %p34
        %p248 = pneg %p58
        %p249 = pneg %p55
        %p250 = pneg %p79
        %p251 = pneg %p76
        %p252 = pneg %p100
        %p253 = pneg %p97
        %p254 = pneg %p121
        %p255 = pneg %p118
        %p256 = pneg %p142
        %p257 = pneg %p139
        %p258 = scmp.lt.s32.totalorder %s21, 1
        %s259 = scalar_select %p258, %s21, 1
        %s260 = smul.addr %s259, 2
        %s261 = smul.addr %s260, 8
        %s262 = scalar_lea.vmem %s6, %s261
        %p263 = pneg %p168
        %p264 = pneg %p165
        %p265 = pneg %p194
        %p266 = pneg %p191
        %s267 = sand.u32 %s181, 1
        %s268 = scalar_lea.sflag [#allocation3], %s267
        %s269 = sand.u32 %s181, 1
        %s270 = smul.addr %s269, 8
        %s271 = scalar_lea.vmem [#allocation2], %s270
        %p272 = scmp.lt.s32.totalorder %s21, 1
        %s273 = scalar_select %p272, %s21, 1
        %s274 = smul.addr %s273, 2
        %s275 = smul.addr %s274, 8
        %s276 = scalar_lea.vmem %s6, %s275
        %v277 = vld [vmem:[%s276] sm:$0xff]
        %v278 = vld [vmem:[%s276 + $0x8] sm:$0xff]
        %v279 = vld [vmem:[%s0] sm:$0xff]
        %v280 = vld [vmem:[%s0 + $0x8] sm:$0xff]
        %v281 = vld [vmem:[%s0 + $0x10] sm:$0xff]
        %v282 = vld [vmem:[%s0 + $0x18] sm:$0xff]
        %vm283 = vcmask 130048
        %v285 = vsel %vm283, %v279, 0
        %v288 = vsel %vm283, %v280, 0
        %v291 = vsel %vm283, %v281, 0
        %v294 = vsel %vm283, %v282, 0
        %296 = vmatprep.subr.mxu0 0.0
        %297 = vmatpush1.msra.mxu0 %v277
        %298 = vmatprep.subr.mxu0 0.0
        %299 = vmatpush1.msra.mxu0 %v278
        %300 = vmatprep.subr.mxu0 0.0
        %301 = vmatpush1.msra.mxu0 0.0
        %302 = vmatprep.subr.mxu0 0.0
        %303 = vmatpush1.msra.mxu0 0.0
        %304 = vmatprep.subr.mxu0 0.0
        %305 = vmatpush1.msra.mxu0 0.0
        %306 = vmatprep.subr.mxu0 0.0
        %307 = vmatpush1.msra.mxu0 0.0
        %308 = vmatprep.subr.mxu0 0.0
        %309 = vmatpush1.msra.mxu0 0.0
        %310 = vmatprep.subr.mxu0 0.0
        %311 = vmatpush1.msra.mxu0 0.0
        %312 = vmatprep.subr.mxu0 0.0
        %313 = vmatpush1.msra.mxu0 0.0
        %314 = vmatprep.subr.mxu0 0.0
        %315 = vmatpush1.msra.mxu0 0.0
        %316 = vmatprep.subr.mxu0 0.0
        %317 = vmatpush1.msra.mxu0 0.0
        %318 = vmatprep.subr.mxu0 0.0
        %319 = vmatpush1.msra.mxu0 0.0
        %320 = vmatprep.subr.mxu0 0.0
        %321 = vmatpush1.msra.mxu0 0.0
        %322 = vmatprep.subr.mxu0 0.0
        %323 = vmatpush1.msra.mxu0 0.0
        %324 = vmatprep.subr.mxu0 0.0
        %325 = vmatpush1.msra.mxu0 0.0
        %326 = vmatprep.subr.mxu0 0.0
        %327 = vmatpush1.msra.mxu0 0.0
        %328 = vmatprep.subr.mxu0 0.0
        %329 = vmatpush1.msra.mxu0 0.0
        %330 = vmatprep.subr.mxu0 0.0
        %331 = vmatpush1.msra.mxu0 0.0
        %332 = vmatprep.subr.mxu0 0.0
        %333 = vmatpush1.msra.mxu0 0.0
        %334 = vmatprep.subr.mxu0 0.0
        %335 = vmatpush1.msra.mxu0 0.0
        %336 = vmatprep.subr.mxu0 0.0
        %337 = vmatpush1.msra.mxu0 0.0
        %338 = vmatprep.subr.mxu0 0.0
        %339 = vmatpush1.msra.mxu0 0.0
        %340 = vmatprep.subr.mxu0 0.0
        %341 = vmatpush1.msra.mxu0 0.0
        %342 = vmatprep.subr.mxu0 0.0
        %343 = vmatpush1.msra.mxu0 0.0
        %344 = vmatprep.subr.mxu0 0.0
        %345 = vmatpush1.msra.mxu0 0.0
        %346 = vmatprep.subr.mxu0 0.0
        %347 = vmatpush1.msra.mxu0 0.0
        %348 = vmatprep.subr.mxu0 0.0
        %349 = vmatpush1.msra.mxu0 0.0
        %350 = vmatprep.subr.mxu0 0.0
        %351 = vmatpush1.msra.mxu0 0.0
        %352 = vmatprep.subr.mxu0 0.0
        %353 = vmatpush1.msra.mxu0 0.0
        %354 = vmatprep.subr.mxu0 0.0
        %355 = vmatpush1.msra.mxu0 0.0
        %356 = vmatprep.subr.mxu0 0.0
        %357 = vmatpush1.msra.mxu0 0.0
        %358 = vmatprep.subr.mxu0 0.0
        %359 = vmatpush1.msra.mxu0 0.0
        %360 = vmatprep.mubr.f32.mxu0 0.0
        %361 = vmatmul.mubr.f32.gmra.mrb[0].mxu0 %v285
        %v362 = vpop.f32.mrb[0].mxu0
        %v363 = vadd.f32 0.0, %v362
        %v364 = vpop.f32.mrb[0].mxu0
        %365 = vmatprep.mubr.f32.mxu0 0.0
        %366 = vmatmul.mubr.f32.gmra.mrb[0].mxu0 %v288
        %v367 = vpop.f32.mrb[0].mxu0
        %v368 = vadd.f32 0.0, %v367
        %v369 = vpop.f32.mrb[0].mxu0
        %370 = vmatprep.mubr.f32.mxu0 0.0
        %371 = vmatmul.mubr.f32.gmra.mrb[0].mxu0 %v291
        %v372 = vpop.f32.mrb[0].mxu0
        %v373 = vadd.f32 0.0, %v372
        %v374 = vpop.f32.mrb[0].mxu0
        %375 = vmatprep.mubr.f32.mxu0 0.0
        %376 = vmatmul.mubr.f32.gmra.mrb[0].mxu0 %v294
        %v377 = vpop.f32.mrb[0].mxu0
        %v378 = vadd.f32 0.0, %v377
        %v379 = vpop.f32.mrb[0].mxu0
        %380 = vdwg.mxu0
        %v381 = vld [vmem:[%s1] sm:$0xff]
        %v382 = vld [vmem:[%s1 + $0x8] sm:$0xff]
        %v383 = vld [vmem:[%s1 + $0x10] sm:$0xff]
        %v384 = vld [vmem:[%s1 + $0x18] sm:$0xff]
        %v385 = vld [vmem:[%s1 + $0x20] sm:$0xff]
        %v386 = vld [vmem:[%s1 + $0x28] sm:$0xff]
        %v387 = vld [vmem:[%s1 + $0x30] sm:$0xff]
        %v388 = vld [vmem:[%s1 + $0x38] sm:$0xff]
        %v389 = vld [vmem:[%s1 + $0x40] sm:$0xff]
        %v390 = vld [vmem:[%s1 + $0x48] sm:$0xff]
        %v391 = vld [vmem:[%s1 + $0x50] sm:$0xff]
        %v392 = vld [vmem:[%s1 + $0x58] sm:$0xff]
        %v393 = vld [vmem:[%s1 + $0x60] sm:$0xff]
        %v394 = vld [vmem:[%s1 + $0x68] sm:$0xff]
        %v395 = vld [vmem:[%s1 + $0x70] sm:$0xff]
        %v396 = vld [vmem:[%s1 + $0x78] sm:$0xff]
        %397 = vmatprep.subr.mxu0 0.0
        %398 = vmatpush1.msra.mxu0 %v381
        %399 = vmatprep.subr.mxu0 0.0
        %400 = vmatpush1.msra.mxu0 %v382
        %401 = vmatprep.subr.mxu0 0.0
        %402 = vmatpush1.msra.mxu0 %v383
        %403 = vmatprep.subr.mxu0 0.0
        %404 = vmatpush1.msra.mxu0 %v384
        %405 = vmatprep.subr.mxu0 0.0
        %406 = vmatpush1.msra.mxu0 %v385
        %407 = vmatprep.subr.mxu0 0.0
        %408 = vmatpush1.msra.mxu0 %v386
        %409 = vmatprep.subr.mxu0 0.0
        %410 = vmatpush1.msra.mxu0 %v387
        %411 = vmatprep.subr.mxu0 0.0
        %412 = vmatpush1.msra.mxu0 %v388
        %413 = vmatprep.subr.mxu0 0.0
        %414 = vmatpush1.msra.mxu0 %v389
        %415 = vmatprep.subr.mxu0 0.0
        %416 = vmatpush1.msra.mxu0 %v390
        %417 = vmatprep.subr.mxu0 0.0
        %418 = vmatpush1.msra.mxu0 %v391
        %419 = vmatprep.subr.mxu0 0.0
        %420 = vmatpush1.msra.mxu0 %v392
        %421 = vmatprep.subr.mxu0 0.0
        %422 = vmatpush1.msra.mxu0 %v393
        %423 = vmatprep.subr.mxu0 0.0
        %424 = vmatpush1.msra.mxu0 %v394
        %425 = vmatprep.subr.mxu0 0.0
        %426 = vmatpush1.msra.mxu0 %v395
        %427 = vmatprep.subr.mxu0 0.0
        %428 = vmatpush1.msra.mxu0 %v396
        %429 = vmatprep.subr.mxu0 0.0
        %430 = vmatpush1.msra.mxu0 0.0
        %431 = vmatprep.subr.mxu0 0.0
        %432 = vmatpush1.msra.mxu0 0.0
        %433 = vmatprep.subr.mxu0 0.0
        %434 = vmatpush1.msra.mxu0 0.0
        %435 = vmatprep.subr.mxu0 0.0
        %436 = vmatpush1.msra.mxu0 0.0
        %437 = vmatprep.subr.mxu0 0.0
        %438 = vmatpush1.msra.mxu0 0.0
        %439 = vmatprep.subr.mxu0 0.0
        %440 = vmatpush1.msra.mxu0 0.0
        %441 = vmatprep.subr.mxu0 0.0
        %442 = vmatpush1.msra.mxu0 0.0
        %443 = vmatprep.subr.mxu0 0.0
        %444 = vmatpush1.msra.mxu0 0.0
        %445 = vmatprep.subr.mxu0 0.0
        %446 = vmatpush1.msra.mxu0 0.0
        %447 = vmatprep.subr.mxu0 0.0
        %448 = vmatpush1.msra.mxu0 0.0
        %449 = vmatprep.subr.mxu0 0.0
        %450 = vmatpush1.msra.mxu0 0.0
        %451 = vmatprep.subr.mxu0 0.0
        %452 = vmatpush1.msra.mxu0 0.0
        %453 = vmatprep.subr.mxu0 0.0
        %454 = vmatpush1.msra.mxu0 0.0
        %455 = vmatprep.subr.mxu0 0.0
        %456 = vmatpush1.msra.mxu0 0.0
        %457 = vmatprep.subr.mxu0 0.0
        %458 = vmatpush1.msra.mxu0 0.0
        %459 = vmatprep.subr.mxu0 0.0
        %460 = vmatpush1.msra.mxu0 0.0
        %461 = vmatprep.mubr.f32.mxu0 0.0
        %462 = vmatmul.mubr.f32.gmra.mrb[0].mxu0 %v363
        %v463 = vpop.f32.mrb[0].mxu0
        %v464 = vadd.f32 0.0, %v463
        %v465 = vpop.f32.mrb[0].mxu0
        %466 = vmatprep.mubr.f32.mxu0 0.0
        %467 = vmatmul.mubr.f32.gmra.mrb[0].mxu0 %v368
        %v468 = vpop.f32.mrb[0].mxu0
        %v469 = vadd.f32 0.0, %v468
        %v470 = vpop.f32.mrb[0].mxu0
        %471 = vmatprep.mubr.f32.mxu0 0.0
        %472 = vmatmul.mubr.f32.gmra.mrb[0].mxu0 %v373
        %v473 = vpop.f32.mrb[0].mxu0
        %v474 = vadd.f32 0.0, %v473
        %v475 = vpop.f32.mrb[0].mxu0
        %476 = vmatprep.mubr.f32.mxu0 0.0
        %477 = vmatmul.mubr.f32.gmra.mrb[0].mxu0 %v378
        %v478 = vpop.f32.mrb[0].mxu0
        %v479 = vadd.f32 0.0, %v478
        %v480 = vpop.f32.mrb[0].mxu0
        %481 = vdwg.mxu0
        %v482 = vld [vmem:[%s2] sm:$0xff]
        %v483 = vld [vmem:[%s2 + $0x8] sm:$0xff]
        %v484 = vld [vmem:[%s2 + $0x10] sm:$0xff]
        %v485 = vld [vmem:[%s2 + $0x18] sm:$0xff]
        %v486 = vld [vmem:[%s2 + $0x20] sm:$0xff]
        %v487 = vld [vmem:[%s2 + $0x28] sm:$0xff]
        %v488 = vld [vmem:[%s2 + $0x30] sm:$0xff]
        %v489 = vld [vmem:[%s2 + $0x38] sm:$0xff]
        %v490 = vld [vmem:[%s2 + $0x40] sm:$0xff]
        %v491 = vld [vmem:[%s2 + $0x48] sm:$0xff]
        %v492 = vld [vmem:[%s2 + $0x50] sm:$0xff]
        %v493 = vld [vmem:[%s2 + $0x58] sm:$0xff]
        %v494 = vld [vmem:[%s2 + $0x60] sm:$0xff]
        %v495 = vld [vmem:[%s2 + $0x68] sm:$0xff]
        %v496 = vld [vmem:[%s2 + $0x70] sm:$0xff]
        %v497 = vld [vmem:[%s2 + $0x78] sm:$0xff]
        %498 = vmatprep.subr.mxu0 0.0
        %499 = vmatpush1.msra.mxu0 %v482
        %500 = vmatprep.subr.mxu0 0.0
        %501 = vmatpush1.msra.mxu0 %v483
        %502 = vmatprep.subr.mxu0 0.0
        %503 = vmatpush1.msra.mxu0 %v484
        %504 = vmatprep.subr.mxu0 0.0
        %505 = vmatpush1.msra.mxu0 %v485
        %506 = vmatprep.subr.mxu0 0.0
        %507 = vmatpush1.msra.mxu0 %v486
        %508 = vmatprep.subr.mxu0 0.0
        %509 = vmatpush1.msra.mxu0 %v487
        %510 = vmatprep.subr.mxu0 0.0
        %511 = vmatpush1.msra.mxu0 %v488
        %512 = vmatprep.subr.mxu0 0.0
        %513 = vmatpush1.msra.mxu0 %v489
        %514 = vmatprep.subr.mxu0 0.0
        %515 = vmatpush1.msra.mxu0 %v490
        %516 = vmatprep.subr.mxu0 0.0
        %517 = vmatpush1.msra.mxu0 %v491
        %518 = vmatprep.subr.mxu0 0.0
        %519 = vmatpush1.msra.mxu0 %v492
        %520 = vmatprep.subr.mxu0 0.0
        %521 = vmatpush1.msra.mxu0 %v493
        %522 = vmatprep.subr.mxu0 0.0
        %523 = vmatpush1.msra.mxu0 %v494
        %524 = vmatprep.subr.mxu0 0.0
        %525 = vmatpush1.msra.mxu0 %v495
        %526 = vmatprep.subr.mxu0 0.0
        %527 = vmatpush1.msra.mxu0 %v496
        %528 = vmatprep.subr.mxu0 0.0
        %529 = vmatpush1.msra.mxu0 %v497
        %530 = vmatprep.subr.mxu0 0.0
        %531 = vmatpush1.msra.mxu0 0.0
        %532 = vmatprep.subr.mxu0 0.0
        %533 = vmatpush1.msra.mxu0 0.0
        %534 = vmatprep.subr.mxu0 0.0
        %535 = vmatpush1.msra.mxu0 0.0
        %536 = vmatprep.subr.mxu0 0.0
        %537 = vmatpush1.msra.mxu0 0.0
        %538 = vmatprep.subr.mxu0 0.0
        %539 = vmatpush1.msra.mxu0 0.0
        %540 = vmatprep.subr.mxu0 0.0
        %541 = vmatpush1.msra.mxu0 0.0
        %542 = vmatprep.subr.mxu0 0.0
        %543 = vmatpush1.msra.mxu0 0.0
        %544 = vmatprep.subr.mxu0 0.0
        %545 = vmatpush1.msra.mxu0 0.0
        %546 = vmatprep.subr.mxu0 0.0
        %547 = vmatpush1.msra.mxu0 0.0
        %548 = vmatprep.subr.mxu0 0.0
        %549 = vmatpush1.msra.mxu0 0.0
        %550 = vmatprep.subr.mxu0 0.0
        %551 = vmatpush1.msra.mxu0 0.0
        %552 = vmatprep.subr.mxu0 0.0
        %553 = vmatpush1.msra.mxu0 0.0
        %554 = vmatprep.subr.mxu0 0.0
        %555 = vmatpush1.msra.mxu0 0.0
        %556 = vmatprep.subr.mxu0 0.0
        %557 = vmatpush1.msra.mxu0 0.0
        %558 = vmatprep.subr.mxu0 0.0
        %559 = vmatpush1.msra.mxu0 0.0
        %560 = vmatprep.subr.mxu0 0.0
        %561 = vmatpush1.msra.mxu0 0.0
        %562 = vmatprep.mubr.f32.mxu0 0.0
        %563 = vmatmul.mubr.f32.gmra.mrb[0].mxu0 %v363
        %v564 = vpop.f32.mrb[0].mxu0
        %v565 = vadd.f32 0.0, %v564
        %v566 = vpop.f32.mrb[0].mxu0
        %567 = vmatprep.mubr.f32.mxu0 0.0
        %568 = vmatmul.mubr.f32.gmra.mrb[0].mxu0 %v368
        %v569 = vpop.f32.mrb[0].mxu0
        %v570 = vadd.f32 0.0, %v569
        %v571 = vpop.f32.mrb[0].mxu0
        %572 = vmatprep.mubr.f32.mxu0 0.0
        %573 = vmatmul.mubr.f32.gmra.mrb[0].mxu0 %v373
        %v574 = vpop.f32.mrb[0].mxu0
        %v575 = vadd.f32 0.0, %v574
        %v576 = vpop.f32.mrb[0].mxu0
        %577 = vmatprep.mubr.f32.mxu0 0.0
        %578 = vmatmul.mubr.f32.gmra.mrb[0].mxu0 %v378
        %v579 = vpop.f32.mrb[0].mxu0
        %v580 = vadd.f32 0.0, %v579
        %v581 = vpop.f32.mrb[0].mxu0
        %582 = vdwg.mxu0
        %v583 = vsub.f32 %v464, %v575
        %v584 = vsub.f32 %v469, %v580
        %v585 = vadd.f32 %v565, %v474
        %v586 = vadd.f32 %v570, %v479
        %v587 = vmul.f32 %v583, %v583
        %v588 = vmul.f32 %v584, %v584
        %v589 = vmul.f32 %v585, %v585
        %v590 = vmul.f32 %v586, %v586
        %v591 = vadd.f32 %v587, %v589
        %v592 = vadd.f32 %v588, %v590
        %v593 = vrsqrt.pop %v591
        %v594 = vmul.f32 %v591, %v593
        %vm595 = vcmp.eq.f32.partialorder %v591, inf
        %v596 = vsel %vm595, %v591, %v594
        %vm597 = vcmp.eq.f32.partialorder %v591, 0.0
        %v598 = vand.u32 %v591, 2147483648
        %v599 = vsel %vm597, %v598, %v596
        %v600 = vrsqrt.pop %v592
        %v601 = vmul.f32 %v592, %v600
        %vm602 = vcmp.eq.f32.partialorder %v592, inf
        %v603 = vsel %vm602, %v592, %v601
        %vm604 = vcmp.eq.f32.partialorder %v592, 0.0
        %v605 = vand.u32 %v592, 2147483648
        %v606 = vsel %vm604, %v605, %v603
        %609 = vrot.lane.b32.xlu0 %v599, 92
        %v610 = vpop.permute.xlu0 %609
        %611 = vrot.lane.b32.xlu0 %v606, 92
        %v612 = vpop.permute.xlu0 %611
        %v615 = vsub.f32 %v599, %v610
        %v616 = vsub.f32 %v606, %v612
        %v617 = vand.u32 2147483647, %v615
        %v618 = vand.u32 2147483647, %v616
        %v619 = vld [vmem:[%s4] sm:$0x1]
        %vm620 = vcmask 293888
        %v621 = vsel %vm620, %v617, 0.0
        %v622 = vsel %vm620, %v618, 0.0
        %v623 = vadd.f32 %v621, %v622
        %624 = vadd.xlane.f32.xlu0 %v623
        %v625 = vpop.xlane.xlu0 %624
        %v626 = vrot.slane %v625, 4
        %v627 = vadd.f32 %v625, %v626
        %v628 = vrot.slane %v627, 2
        %v629 = vadd.f32 %v627, %v628
        %v630 = vrot.slane %v629, 1
        %v631 = vadd.f32 %v629, %v630
        %s632 = vtos %v631
        %v633 = vld [vmem:[%s3] sm:$0xff]
        %v634 = vld [vmem:[%s3 + $0x8] sm:$0xff]
        %v635 = vmul.f32 %v633, %v617
        %v636 = vmul.f32 %v634, %v618
        %v637 = vsel %vm620, %v635, 0.0
        %v638 = vsel %vm620, %v636, 0.0
        %v639 = vadd.f32 %v637, %v638
        %640 = vadd.xlane.f32.xlu0 %v639
        %v641 = vpop.xlane.xlu0 %640
        %v642 = vrot.slane %v641, 4
        %v643 = vadd.f32 %v641, %v642
        %v644 = vrot.slane %v643, 2
        %v645 = vadd.f32 %v643, %v644
        %v646 = vrot.slane %v645, 1
        %v647 = vadd.f32 %v645, %v646
        %s648 = vtos %v647
        %v650 = vlaneseq
        %v651 = vshrl.u32 %v650, 7
        %v652 = vsub.s32 0, %v651
        %v653 = vrot.slane %v619, %v652
        %v655 = vmul.f32 %v653, %v617
        %v656 = vmul.f32 %v653, %v618
        %v657 = vsel %vm620, %v655, 0.0
        %v658 = vsel %vm620, %v656, 0.0
        %v659 = vadd.f32 %v657, %v658
        %660 = vadd.xlane.f32.xlu0 %v659
        %v661 = vpop.xlane.xlu0 %660
        %v662 = vrot.slane %v661, 4
        %v663 = vadd.f32 %v661, %v662
        %v664 = vrot.slane %v663, 2
        %v665 = vadd.f32 %v663, %v664
        %v666 = vrot.slane %v665, 1
        %v667 = vadd.f32 %v665, %v666
        %s668 = vtos %v667
        %s669 = ssub.f32 %s668, %s648
        %672 = vrot.lane.b32.xlu0 %v583, 92
        %v673 = vpop.permute.xlu0 %672
        %674 = vrot.lane.b32.xlu0 %v584, 92
        %v675 = vpop.permute.xlu0 %674
        %v678 = vmul.f32 %v583, %v673
        %v679 = vmul.f32 %v584, %v675
        %682 = vrot.lane.b32.xlu0 %v585, 92
        %v683 = vpop.permute.xlu0 %682
        %684 = vrot.lane.b32.xlu0 %v586, 92
        %v685 = vpop.permute.xlu0 %684
        %v688 = vmul.f32 %v585, %v683
        %v689 = vmul.f32 %v586, %v685
        %v690 = vadd.f32 %v678, %v688
        %v691 = vadd.f32 %v679, %v689
        %v692 = vmul.f32 %v585, %v673
        %v693 = vmul.f32 %v586, %v675
        %v694 = vmul.f32 %v583, %v683
        %v695 = vmul.f32 %v584, %v685
        %v696 = vsub.f32 %v692, %v694
        %v697 = vsub.f32 %v693, %v695
        %v698 = vand.u32 2147483647, %v696
        %v699 = vand.u32 2147483647, %v697
        %v700 = vmin.f32 %v698, 1e+37
        %v701 = vmin.f32 %v699, 1e+37
        %v702 = vand.u32 2147483647, %v690
        %v703 = vand.u32 2147483647, %v691
        %v704 = vmin.f32 %v702, 1e+37
        %v705 = vmin.f32 %v703, 1e+37
        %v706 = vmin.f32 %v700, %v704
        %v707 = vmin.f32 %v701, %v705
        %v708 = vmax.f32 %v700, %v704
        %v709 = vmax.f32 %v701, %v705
        %v710 = vmax.f32 %v708, 1e-37
        %v711 = vmax.f32 %v709, 1e-37
        %v712 = vmul.f32 %v710, 0.41421357
        %v713 = vmul.f32 %v711, 0.41421357
        %vm714 = vcmp.gt.f32.partialorder %v706, %v712
        %vm715 = vcmp.gt.f32.partialorder %v707, %v713
        %v716 = vsub.f32 %v706, %v710
        %v717 = vsub.f32 %v707, %v711
        %v718 = vsel %vm714, %v716, %v706
        %v719 = vsel %vm715, %v717, %v707
        %v720 = vadd.f32 %v706, %v710
        %v721 = vadd.f32 %v707, %v711
        %v722 = vsel %vm714, %v720, %v710
        %v723 = vsel %vm715, %v721, %v711
        %v724 = vrcp.pop %v722
        %v725 = vrcp.pop %v723
        %v726 = vmul.f32 %v722, %v724
        %v727 = vmul.f32 %v723, %v725
        %v728 = vsub.f32 2.0, %v726
        %v729 = vsub.f32 2.0, %v727
        %v730 = vmul.f32 %v724, %v728
        %v731 = vmul.f32 %v725, %v729
        %v732 = vmul.f32 %v718, %v730
        %v733 = vmul.f32 %v719, %v731
        %v734 = vmul.f32 %v732, %v732
        %v735 = vmul.f32 %v733, %v733
        %v736 = vmul.f32 %v734, 0.080537446
        %v737 = vmul.f32 %v735, 0.080537446
        %v738 = vsub.f32 %v736, 0.13877685
        %v739 = vsub.f32 %v737, 0.13877685
        %v740 = vmul.f32 %v738, %v734
        %v741 = vmul.f32 %v739, %v735
        %v742 = vadd.f32 %v740, 0.19977711
        %v743 = vadd.f32 %v741, 0.19977711
        %v744 = vmul.f32 %v742, %v734
        %v745 = vmul.f32 %v743, %v735
        %v746 = vsub.f32 %v744, 0.3333295
        %v747 = vsub.f32 %v745, 0.3333295
        %v748 = vmul.f32 %v746, %v734
        %v749 = vmul.f32 %v747, %v735
        %v750 = vmul.f32 %v748, %v732
        %v751 = vmul.f32 %v749, %v733
        %v752 = vadd.f32 %v750, %v732
        %v753 = vadd.f32 %v751, %v733
        %v754 = vsel %vm714, 0.7853982, 0.0
        %v755 = vsel %vm715, 0.7853982, 0.0
        %v756 = vadd.f32 %v752, %v754
        %v757 = vadd.f32 %v753, %v755
        %vm758 = vcmp.gt.f32.partialorder %v700, %v704
        %vm759 = vcmp.gt.f32.partialorder %v701, %v705
        %v760 = vsub.f32 1.5707964, %v756
        %v761 = vsub.f32 1.5707964, %v757
        %v762 = vsel %vm758, %v760, %v756
        %v763 = vsel %vm759, %v761, %v757
        %vm764 = vcmp.lt.f32.partialorder %v690, 0.0
        %vm765 = vcmp.lt.f32.partialorder %v691, 0.0
        %v766 = vsub.f32 3.1415927, %v762
        %v767 = vsub.f32 3.1415927, %v763
        %v768 = vsel %vm764, %v766, %v762
        %v769 = vsel %vm765, %v767, %v763
        %vm770 = vcmp.lt.f32.partialorder %v696, 0.0
        %vm771 = vcmp.lt.f32.partialorder %v697, 0.0
        %v772 = vsub.f32 0.0, %v768
        %v773 = vsub.f32 0.0, %v769
        %v774 = vsel %vm770, %v772, %v768
        %v775 = vsel %vm771, %v773, %v769
        %v776 = vand.u32 2147483647, %v774
        %v777 = vand.u32 2147483647, %v775
        %v778 = vsel %vm620, %v776, 0.0
        %v779 = vsel %vm620, %v777, 0.0
        %v780 = vadd.f32 %v778, %v779
        %781 = vadd.xlane.f32.xlu0 %v780
        %v782 = vpop.xlane.xlu0 %781
        %v783 = vrot.slane %v782, 4
        %v784 = vadd.f32 %v782, %v783
        %v785 = vrot.slane %v784, 2
        %v786 = vadd.f32 %v784, %v785
        %v787 = vrot.slane %v786, 1
        %v788 = vadd.f32 %v786, %v787
        %s789 = vtos %v788
        %792 = vrot.lane.b32.xlu0 %v591, 92
        %v793 = vpop.permute.xlu0 %792
        %794 = vrot.lane.b32.xlu0 %v592, 92
        %v795 = vpop.permute.xlu0 %794
        %v798 = vsub.f32 %v591, %v793
        %v799 = vsub.f32 %v592, %v795
        %v800 = vmul.f32 %v798, %v653
        %v801 = vmul.f32 %v799, %v653
        %v802 = vld [vmem:[%s5] sm:$0xff]
        %v803 = vld [vmem:[%s5 + $0x8] sm:$0xff]
        %v804 = vld [vmem:[%s5 + $0x10] sm:$0xff]
        %v805 = vld [vmem:[%s5 + $0x18] sm:$0xff]
        %v806 = vld [vmem:[%s5 + $0x20] sm:$0xf]
        %v808 = vsel %vm620, %v800, 0
        %v811 = vsel %vm620, %v801, 0
        %vm813 = vcmask 1043456
        %v815 = vsel %vm813, %v806, 0
        %817 = vmatprep.subr.mxu0 0.0
        %818 = vmatpush1.msra.mxu0 %v802
        %819 = vmatprep.subr.mxu0 0.0
        %820 = vmatpush1.msra.mxu0 %v803
        %821 = vmatprep.subr.mxu0 0.0
        %822 = vmatpush1.msra.mxu0 %v804
        %823 = vmatprep.subr.mxu0 0.0
        %824 = vmatpush1.msra.mxu0 %v805
        %825 = vmatprep.subr.mxu0 0.0
        %826 = vmatpush1.msra.mxu0 %v815
        %827 = vmatprep.subr.mxu0 0.0
        %828 = vmatpush1.msra.mxu0 0.0
        %829 = vmatprep.subr.mxu0 0.0
        %830 = vmatpush1.msra.mxu0 0.0
        %831 = vmatprep.subr.mxu0 0.0
        %832 = vmatpush1.msra.mxu0 0.0
        %833 = vmatprep.subr.mxu0 0.0
        %834 = vmatpush1.msra.mxu0 0.0
        %835 = vmatprep.subr.mxu0 0.0
        %836 = vmatpush1.msra.mxu0 0.0
        %837 = vmatprep.subr.mxu0 0.0
        %838 = vmatpush1.msra.mxu0 0.0
        %839 = vmatprep.subr.mxu0 0.0
        %840 = vmatpush1.msra.mxu0 0.0
        %841 = vmatprep.subr.mxu0 0.0
        %842 = vmatpush1.msra.mxu0 0.0
        %843 = vmatprep.subr.mxu0 0.0
        %844 = vmatpush1.msra.mxu0 0.0
        %845 = vmatprep.subr.mxu0 0.0
        %846 = vmatpush1.msra.mxu0 0.0
        %847 = vmatprep.subr.mxu0 0.0
        %848 = vmatpush1.msra.mxu0 0.0
        %849 = vmatprep.subr.mxu0 0.0
        %850 = vmatpush1.msra.mxu0 0.0
        %851 = vmatprep.subr.mxu0 0.0
        %852 = vmatpush1.msra.mxu0 0.0
        %853 = vmatprep.subr.mxu0 0.0
        %854 = vmatpush1.msra.mxu0 0.0
        %855 = vmatprep.subr.mxu0 0.0
        %856 = vmatpush1.msra.mxu0 0.0
        %857 = vmatprep.subr.mxu0 0.0
        %858 = vmatpush1.msra.mxu0 0.0
        %859 = vmatprep.subr.mxu0 0.0
        %860 = vmatpush1.msra.mxu0 0.0
        %861 = vmatprep.subr.mxu0 0.0
        %862 = vmatpush1.msra.mxu0 0.0
        %863 = vmatprep.subr.mxu0 0.0
        %864 = vmatpush1.msra.mxu0 0.0
        %865 = vmatprep.subr.mxu0 0.0
        %866 = vmatpush1.msra.mxu0 0.0
        %867 = vmatprep.subr.mxu0 0.0
        %868 = vmatpush1.msra.mxu0 0.0
        %869 = vmatprep.subr.mxu0 0.0
        %870 = vmatpush1.msra.mxu0 0.0
        %871 = vmatprep.subr.mxu0 0.0
        %872 = vmatpush1.msra.mxu0 0.0
        %873 = vmatprep.subr.mxu0 0.0
        %874 = vmatpush1.msra.mxu0 0.0
        %875 = vmatprep.subr.mxu0 0.0
        %876 = vmatpush1.msra.mxu0 0.0
        %877 = vmatprep.subr.mxu0 0.0
        %878 = vmatpush1.msra.mxu0 0.0
        %879 = vmatprep.subr.mxu0 0.0
        %880 = vmatpush1.msra.mxu0 0.0
        %881 = vmatprep.mubr.f32.mxu0 0.0
        %882 = vmatmul.mubr.f32.gmra.mrb[0].mxu0 %v808
        %v883 = vpop.f32.mrb[0].mxu0
        %v884 = vadd.f32 0.0, %v883
        %v885 = vpop.f32.mrb[0].mxu0
        %886 = vmatprep.mubr.f32.mxu0 0.0
        %887 = vmatmul.mubr.f32.gmra.mrb[0].mxu0 %v811
        %v888 = vpop.f32.mrb[0].mxu0
        %v889 = vadd.f32 0.0, %v888
        %v890 = vpop.f32.mrb[0].mxu0
        %891 = vdwg.mxu0
        %vm892 = vcmask 31744
        %v893 = vsel %vm892, %v884, 0.0
        %v894 = vsel %vm892, %v889, 0.0
        %v895 = vadd.f32 %v893, %v894
        %v896 = vrot.slane %v895, 4
        %v897 = vadd.f32 %v895, %v896
        %v898 = vrot.slane %v897, 2
        %v899 = vadd.f32 %v897, %v898
        %v900 = vrot.slane %v899, 1
        %v901 = vadd.f32 %v899, %v900
        %v902 = vand.u32 2147483647, %v901
        %vm903 = vcmask 24576
        %v904 = vsel %vm903, %v902, 0.0
        %905 = vadd.xlane.f32.xlu0 %v904
        %v906 = vpop.xlane.xlu0 %905
        %v907 = vrot.slane %v906, 4
        %v908 = vadd.f32 %v906, %v907
        %v909 = vrot.slane %v908, 2
        %v910 = vadd.f32 %v908, %v909
        %v911 = vrot.slane %v910, 1
        %v912 = vadd.f32 %v910, %v911
        %s913 = vtos %v912
        %916 = vrot.lane.b32.xlu0 %v277, 64
        %v917 = vpop.permute.xlu0 %916
        %918 = vrot.lane.b32.xlu0 %v278, 64
        %v919 = vpop.permute.xlu0 %918
        %v922 = vsub.f32 %v277, %v917
        %v923 = vsub.f32 %v278, %v919
        %v924 = vand.u32 2147483647, %v922
        %v925 = vand.u32 2147483647, %v923
        %vm926 = vcmask 523264
        %v927 = vsel %vm926, %v924, 0.0
        %v928 = vsel %vm926, %v925, 0.0
        %v929 = vadd.f32 %v927, %v928
        %930 = vadd.xlane.f32.xlu0 %v929
        %v931 = vpop.xlane.xlu0 %930
        %v932 = vrot.slane %v931, 4
        %v933 = vadd.f32 %v931, %v932
        %v934 = vrot.slane %v933, 2
        %v935 = vadd.f32 %v933, %v934
        %v936 = vrot.slane %v935, 1
        %v937 = vadd.f32 %v935, %v936
        %s938 = vtos %v937
        %v939 = vlaneseq
        %v940 = vand.u32 %v939, 127
        %vm941 = vcmp.eq.s32.totalorder %v940, 0
        %vm942 = vcmp.eq.s32.totalorder %v940, 1
        %vm943 = vcmp.eq.s32.totalorder %v940, 2
        %vm944 = vcmp.eq.s32.totalorder %v940, 3
        %vm945 = vcmp.eq.s32.totalorder %v940, 4
        %vm946 = vcmp.eq.s32.totalorder %v940, 5
        %v947 = vstv %s938
        %v948 = vsel %vm946, %v947, 0.0
        %v949 = vstv %s913
        %v950 = vsel %vm945, %v949, %v948
        %v951 = vstv %s669
        %v952 = vsel %vm944, %v951, %v950
        %v953 = vstv %s648
        %v954 = vsel %vm943, %v953, %v952
        %v955 = vstv %s789
        %v956 = vsel %vm942, %v955, %v954
        %v957 = vstv %s632
        %v958 = vsel %vm941, %v957, %v956
        %959 = vst [vmem:[%s271] sm:$0xff] %v958
        %s960 = sand.u32 %s181, 1
        %s961 = scalar_lea.sflag [#allocation3], %s960
        %s962 = sand.u32 %s181, 1
        %s963 = smul.addr %s962, 8
        %s964 = scalar_lea.vmem [#allocation2], %s963
        // Predicated region
        $region49: #{tpu_custom_call.1} parent=47 // pred_check
          %p965 = pneg %p191
        $region50: #{tpu_custom_call.1} parent=47 // pred_check_branch
          %967 = sbr.rel (%p965) target = $region52
        $region51: #{tpu_custom_call.1} parent=47 // pred_region
          %s969 = ssub.s32 128, 128
          %970 = vsyncadd %s961, %s969
          %s971 = smul.addr %s21, 128
          %s972 = scalar_lea.hbm %s7, %s971
          %s974 = sshll.u32 %s964, 4
          %s975 = int_to_ptr.vmem [resolvable:$true] %s974
          %977 = dma.vmem_to_hbm [thread:$0]  %s975, 128, %s972, %s961
        $region52: #{tpu_custom_call.1} parent=47 // pred_fallthru
          _
      $region48: #{tpu_custom_call.1} parent=5 // pred_fallthru
        _
      %p978 = scmp.le.s32.totalorder 2, %s16
      // Predicated region
      $region53: #{tpu_custom_call.1} parent=5 // pred_check
        %p979 = pneg %p978
      $region54: #{tpu_custom_call.1} parent=5 // pred_check_branch
        %981 = sbr.rel (%p979) target = $region56
      $region55: #{tpu_custom_call.1} parent=5 // pred_region
        %s982 = ssub.s32 %s16, 2
        // Predicated region
        $region57: #{tpu_custom_call.1} parent=55 // pred_check
          %p983 = pneg %p197
        $region58: #{tpu_custom_call.1} parent=55 // pred_check_branch
          %985 = sbr.rel (%p983) target = $region60
        $region59: #{tpu_custom_call.1} parent=55 // pred_region
          %s986 = sand.u32 %s182, 1
          %s987 = scalar_lea.sflag [#allocation3], %s986
          %s988 = sand.u32 %s182, 1
          %s989 = smul.addr %s988, 8
          %s990 = scalar_lea.vmem [#allocation2], %s989
          %991 = dma.done %s987, 128
        $region60: #{tpu_custom_call.1} parent=55 // pred_fallthru
          _
      $region56: #{tpu_custom_call.1} parent=5 // pred_fallthru
        _
    $region6: #{tpu_custom_call.1} parent=1 // loop_footer
      %s20 = sadd.s32 1, %s16
    $region7: #{tpu_custom_call.1} parent=1 // loop_footer_branch
      %15 = sbr.rel target = $region3
    $region8: #{tpu_custom_call.1} parent=1 // loop_exit
      _
    %992 = vsyncpa [#allocation3], 1
    %s993 = scalar_lea.sflag [#allocation3], 1
    %994 = vsyncpa %s993, 1

</llo_original>
